<compile_context>
chip_gen: v5e
topology: v5e:2x2
jax: 0.10.0
libtpu: 0.0.40
codegen_flags: <defaults>
</compile_context>

<pallas_src>
import jax
import jax.numpy as jnp
from jax.experimental import pallas as pl
from jax.experimental.pallas import tpu as pltpu

D_INPUT = 3
D_FILTER = 128
D_OUT = 4          # d_viewdirs is None -> output Linear(128, 4)
PAD_IN = 8         # pad 3 -> 8 input features (cheap, sublane aligned)
PAD_OUT = 8        # pad 4 -> 8 output features
TM = 512           # row tile (big tile -> near HBM roofline, still tiny VMEM)


def _nerf_kernel(x_ref, w0_ref, b0_ref, w1_ref, b1_ref, wo_ref, bo_ref, out_ref):
    # layer 0: relu(x @ W0 + b0)   -- K = 8 matmul, bf16 operands, f32 accumulate
    h = jnp.dot(x_ref[...], w0_ref[...], preferred_element_type=jnp.float32)
    h = jnp.maximum(h + b0_ref[...], 0.0)
    # layer 1: relu(h @ W1 + b1)
    h = jnp.dot(h.astype(jnp.bfloat16), w1_ref[...],
                preferred_element_type=jnp.float32)
    h = jnp.maximum(h + b1_ref[...], 0.0)
    # output layer (no activation), 8-wide padded output
    o = jnp.dot(h.astype(jnp.bfloat16), wo_ref[...],
                preferred_element_type=jnp.float32) + bo_ref[...]
    out_ref[...] = o.astype(out_ref.dtype)


def nerf_forward(x, params):
    """x: (N, D_INPUT) float32.  Returns (N, D_OUT) float32."""
    w0, b0, w1, b1, wo, bo = params
    N = x.shape[0]
    n_pad = pl.cdiv(N, TM) * TM

    # --- plain-JAX glue: narrow zero-padding + bf16 casts for MXU operands ---
    x_p = jnp.zeros((n_pad, PAD_IN), jnp.bfloat16)
    x_p = x_p.at[:N, :D_INPUT].set(x.astype(jnp.bfloat16))
    w0_p = jnp.zeros((PAD_IN, D_FILTER), jnp.bfloat16)
    w0_p = w0_p.at[:D_INPUT, :].set(w0.astype(jnp.bfloat16))
    w1_b = w1.astype(jnp.bfloat16)
    wo_p = jnp.zeros((D_FILTER, PAD_OUT), jnp.bfloat16)
    wo_p = wo_p.at[:, :D_OUT].set(wo.astype(jnp.bfloat16))
    b0_p = b0.reshape(1, D_FILTER).astype(jnp.float32)
    b1_p = b1.reshape(1, D_FILTER).astype(jnp.float32)
    bo_p = jnp.zeros((1, PAD_OUT), jnp.float32).at[0, :D_OUT].set(bo)

    grid = (n_pad // TM,)
    full = lambda i: (0, 0)
    rows = lambda i: (i, 0)

    flops = 2 * n_pad * (PAD_IN * D_FILTER + D_FILTER * D_FILTER + D_FILTER * PAD_OUT)
    bytes_accessed = (x_p.size * 2 + w0_p.size * 2 + w1_b.size * 2 + wo_p.size * 2
                      + (b0_p.size + b1_p.size + bo_p.size) * 4
                      + n_pad * PAD_OUT * 4)

    out_p = pl.pallas_call(
        _nerf_kernel,
        out_shape=jax.ShapeDtypeStruct((n_pad, PAD_OUT), jnp.float32),
        grid_spec=pltpu.PrefetchScalarGridSpec(
            num_scalar_prefetch=0,
            grid=grid,
            in_specs=[
                pl.BlockSpec((TM, PAD_IN), rows),          # x tile (bf16)
                pl.BlockSpec((PAD_IN, D_FILTER), full),    # W0 (bf16, padded rows)
                pl.BlockSpec((1, D_FILTER), full),         # b0 (f32)
                pl.BlockSpec((D_FILTER, D_FILTER), full),  # W1 (bf16)
                pl.BlockSpec((1, D_FILTER), full),         # b1 (f32)
                pl.BlockSpec((D_FILTER, PAD_OUT), full),   # W_out (bf16, padded cols)
                pl.BlockSpec((1, PAD_OUT), full),          # b_out (f32, padded)
            ],
            out_specs=pl.BlockSpec((TM, PAD_OUT), rows),
        ),
        compiler_params=pltpu.CompilerParams(
            dimension_semantics=("parallel",)),
        cost_estimate=pl.CostEstimate(
            flops=flops, transcendentals=0, bytes_accessed=bytes_accessed),
    )(x_p, w0_p, b0_p, w1_b, b1_p, wo_p, bo_p)

    return out_p[:N, :D_OUT]


def init_params(key):
    """Deterministic PyTorch-Linear-style init: U(-1/sqrt(fan_in), 1/sqrt(fan_in))."""
    ks = jax.random.split(key, 6)

    def linear(kw, kb, fan_in, fan_out):
        bound = 1.0 / jnp.sqrt(fan_in)
        w = jax.random.uniform(kw, (fan_in, fan_out), jnp.float32, -bound, bound)
        b = jax.random.uniform(kb, (fan_out,), jnp.float32, -bound, bound)
        return w, b

    w0, b0 = linear(ks[0], ks[1], D_INPUT, D_FILTER)
    w1, b1 = linear(ks[2], ks[3], D_FILTER, D_FILTER)
    wo, bo = linear(ks[4], ks[5], D_FILTER, D_OUT)
    return (w0, b0, w1, b1, wo, bo)


def nerf_reference_bf16(x, params):
    """Reference that mimics the kernel's bf16-operand / f32-accumulate math."""
    w0, b0, w1, b1, wo, bo = params
    bf = jnp.bfloat16
    h = jnp.dot(x.astype(bf), w0.astype(bf), preferred_element_type=jnp.float32)
    h = jax.nn.relu(h + b0)
    h = jnp.dot(h.astype(bf), w1.astype(bf), preferred_element_type=jnp.float32)
    h = jax.nn.relu(h + b1)
    return jnp.dot(h.astype(bf), wo.astype(bf),
                   preferred_element_type=jnp.float32) + bo


def nerf_reference_f32(x, params):
    w0, b0, w1, b1, wo, bo = params
    h = jax.nn.relu(x @ w0 + b0)
    h = jax.nn.relu(h @ w1 + b1)
    return h @ wo + bo


if __name__ == "__main__":
    key = jax.random.PRNGKey(0)
    k_param, k_x = jax.random.split(key)

    params = init_params(k_param)
    N = 1000  # number of sampled points (rays * samples); not a multiple of TM
    x = jax.random.normal(k_x, (N, D_INPUT), jnp.float32)

    out = nerf_forward(x, params)
    out = jax.block_until_ready(out)

    assert out.shape == (N, D_OUT)
    ref_bf16 = nerf_reference_bf16(x, params)
    assert jnp.allclose(out, ref_bf16, atol=1e-3, rtol=1e-2), \
        "mismatch vs bf16-accurate JAX reference"
    ref_f32 = nerf_reference_f32(x, params)
    assert jnp.allclose(out, ref_f32, atol=5e-2, rtol=5e-2), \
        "mismatch vs f32 JAX reference"

    print("KERNEL_OK")
</pallas_src>

<mosaic_0001>
module attributes {stable_mosaic.version = 11 : i64} {
  func.func @_nerf_kernel(%arg0: i32, %arg1: memref<512x8xbf16, #tpu.memory_space<vmem>>, %arg2: memref<8x128xbf16, #tpu.memory_space<vmem>>, %arg3: memref<1x128xf32, #tpu.memory_space<vmem>>, %arg4: memref<128x128xbf16, #tpu.memory_space<vmem>>, %arg5: memref<1x128xf32, #tpu.memory_space<vmem>>, %arg6: memref<128x8xbf16, #tpu.memory_space<vmem>>, %arg7: memref<1x8xf32, #tpu.memory_space<vmem>>, %arg8: memref<512x8xf32, #tpu.memory_space<vmem>>) attributes {dimension_semantics = [#tpu.dimension_semantics<parallel>], iteration_bounds = array<i64: 2>, scalar_prefetch = 0 : i64, scratch_operands = 0 : i64, tpu.core_type = #tpu.core_type<tc>, window_params = [{transform_indices = @transform_0, window_bounds = array<i64: 512, 8>}, {pipeline_mode = #tpu.pipeline_mode<synchronous>, transform_indices = @transform_1, window_bounds = array<i64: 8, 128>}, {pipeline_mode = #tpu.pipeline_mode<synchronous>, transform_indices = @transform_2, window_bounds = array<i64: 1, 128>}, {pipeline_mode = #tpu.pipeline_mode<synchronous>, transform_indices = @transform_3, window_bounds = array<i64: 128, 128>}, {pipeline_mode = #tpu.pipeline_mode<synchronous>, transform_indices = @transform_4, window_bounds = array<i64: 1, 128>}, {pipeline_mode = #tpu.pipeline_mode<synchronous>, transform_indices = @transform_5, window_bounds = array<i64: 128, 8>}, {pipeline_mode = #tpu.pipeline_mode<synchronous>, transform_indices = @transform_6, window_bounds = array<i64: 1, 8>}, {transform_indices = @transform_7, window_bounds = array<i64: 512, 8>}]} {
    %c0 = arith.constant 0 : index
    %c0_0 = arith.constant 0 : index
    %0 = vector.load %arg1[%c0, %c0_0] : memref<512x8xbf16, #tpu.memory_space<vmem>>, vector<512x8xbf16>
    %c0_1 = arith.constant 0 : index
    %c0_2 = arith.constant 0 : index
    %1 = vector.load %arg2[%c0_1, %c0_2] : memref<8x128xbf16, #tpu.memory_space<vmem>>, vector<8x128xbf16>
    %cst = arith.constant dense<0.000000e+00> : vector<512x128xf32>
    %2 = tpu.matmul %0, %1, %cst {dimension_numbers = #tpu.dot_dimension_numbers<[1], [0], [0], [1], [0, 0, 1, 1], [], []>} : vector<512x8xbf16>, vector<8x128xbf16>, vector<512x128xf32> -> vector<512x128xf32>
    %c0_3 = arith.constant 0 : index
    %c0_4 = arith.constant 0 : index
    %3 = vector.load %arg3[%c0_3, %c0_4] : memref<1x128xf32, #tpu.memory_space<vmem>>, vector<1x128xf32>
    %4 = vector.broadcast %3 : vector<1x128xf32> to vector<512x128xf32>
    %5 = arith.addf %2, %4 : vector<512x128xf32>
    %cst_5 = arith.constant 0.000000e+00 : f32
    %6 = vector.broadcast %cst_5 : f32 to vector<512x128xf32>
    %7 = arith.maximumf %5, %6 : vector<512x128xf32>
    %8 = arith.truncf %7 : vector<512x128xf32> to vector<512x128xbf16>
    %c0_6 = arith.constant 0 : index
    %c0_7 = arith.constant 0 : index
    %9 = vector.load %arg4[%c0_6, %c0_7] : memref<128x128xbf16, #tpu.memory_space<vmem>>, vector<128x128xbf16>
    %cst_8 = arith.constant dense<0.000000e+00> : vector<512x128xf32>
    %10 = tpu.matmul %8, %9, %cst_8 {dimension_numbers = #tpu.dot_dimension_numbers<[1], [0], [0], [1], [0, 0, 1, 1], [], []>} : vector<512x128xbf16>, vector<128x128xbf16>, vector<512x128xf32> -> vector<512x128xf32>
    %c0_9 = arith.constant 0 : index
    %c0_10 = arith.constant 0 : index
    %11 = vector.load %arg5[%c0_9, %c0_10] : memref<1x128xf32, #tpu.memory_space<vmem>>, vector<1x128xf32>
    %12 = vector.broadcast %11 : vector<1x128xf32> to vector<512x128xf32>
    %13 = arith.addf %10, %12 : vector<512x128xf32>
    %cst_11 = arith.constant 0.000000e+00 : f32
    %14 = vector.broadcast %cst_11 : f32 to vector<512x128xf32>
    %15 = arith.maximumf %13, %14 : vector<512x128xf32>
    %16 = arith.truncf %15 : vector<512x128xf32> to vector<512x128xbf16>
    %c0_12 = arith.constant 0 : index
    %c0_13 = arith.constant 0 : index
    %17 = vector.load %arg6[%c0_12, %c0_13] : memref<128x8xbf16, #tpu.memory_space<vmem>>, vector<128x8xbf16>
    %cst_14 = arith.constant dense<0.000000e+00> : vector<512x8xf32>
    %18 = tpu.matmul %16, %17, %cst_14 {dimension_numbers = #tpu.dot_dimension_numbers<[1], [0], [0], [1], [0, 0, 1, 1], [], []>} : vector<512x128xbf16>, vector<128x8xbf16>, vector<512x8xf32> -> vector<512x8xf32>
    %c0_15 = arith.constant 0 : index
    %c0_16 = arith.constant 0 : index
    %19 = vector.load %arg7[%c0_15, %c0_16] : memref<1x8xf32, #tpu.memory_space<vmem>>, vector<1x8xf32>
    %20 = vector.broadcast %19 : vector<1x8xf32> to vector<512x8xf32>
    %21 = arith.addf %18, %20 : vector<512x8xf32>
    %c0_17 = arith.constant 0 : index
    %c0_18 = arith.constant 0 : index
    %22 = vector.load %arg8[%c0_17, %c0_18] : memref<512x8xf32, #tpu.memory_space<vmem>>, vector<512x8xf32>
    tpu.vector_store %arg8[%c0_17, %c0_18], %21 {strides = array<i32>} : memref<512x8xf32, #tpu.memory_space<vmem>>, vector<512x8xf32>,
    return
  }
  func.func @transform_0(%arg0: i32) -> (i32, i32) {
    %c0_i32 = arith.constant 0 : i32
    %c0_i32_0 = arith.constant 0 : i32
    return %arg0, %c0_i32 : i32, i32
  }
  func.func @transform_1(%arg0: i32) -> (i32, i32) {
    %c0_i32 = arith.constant 0 : i32
    %c0_i32_0 = arith.constant 0 : i32
    %c0_i32_1 = arith.constant 0 : i32
    return %c0_i32, %c0_i32_0 : i32, i32
  }
  func.func @transform_2(%arg0: i32) -> (i32, i32) {
    %c0_i32 = arith.constant 0 : i32
    %c0_i32_0 = arith.constant 0 : i32
    %c0_i32_1 = arith.constant 0 : i32
    return %c0_i32, %c0_i32_0 : i32, i32
  }
  func.func @transform_3(%arg0: i32) -> (i32, i32) {
    %c0_i32 = arith.constant 0 : i32
    %c0_i32_0 = arith.constant 0 : i32
    %c0_i32_1 = arith.constant 0 : i32
    return %c0_i32, %c0_i32_0 : i32, i32
  }
  func.func @transform_4(%arg0: i32) -> (i32, i32) {
    %c0_i32 = arith.constant 0 : i32
    %c0_i32_0 = arith.constant 0 : i32
    %c0_i32_1 = arith.constant 0 : i32
    return %c0_i32, %c0_i32_0 : i32, i32
  }
  func.func @transform_5(%arg0: i32) -> (i32, i32) {
    %c0_i32 = arith.constant 0 : i32
    %c0_i32_0 = arith.constant 0 : i32
    %c0_i32_1 = arith.constant 0 : i32
    return %c0_i32, %c0_i32_0 : i32, i32
  }
  func.func @transform_6(%arg0: i32) -> (i32, i32) {
    %c0_i32 = arith.constant 0 : i32
    %c0_i32_0 = arith.constant 0 : i32
    %c0_i32_1 = arith.constant 0 : i32
    return %c0_i32, %c0_i32_0 : i32, i32
  }
  func.func @transform_7(%arg0: i32) -> (i32, i32) {
    %c0_i32 = arith.constant 0 : i32
    %c0_i32_0 = arith.constant 0 : i32
    return %arg0, %c0_i32 : i32, i32
  }
}

</mosaic_0001>

<llo_original>
// kernel: tpu_custom_call.1
$region0: #{tpu_custom_call.1}
  #allocation0 [shape = 'u32[]', space=smem, size = 0x4, offset = 0x4, fixed_abs, tag = 'smem constant byte address 0x4 - core index']
  #allocation1 [shape = 'u32[72,128]{1,0:T(1,128)}', space=vmem, size = 0x9000, scoped, tag = 'internal scratch']
  %s0 = inlined_call_operand.vmem [shape: bf16[1024,8], index: 0, kind: input, shape index: {}]
  %s1 = inlined_call_operand.vmem [shape: bf16[8,128], index: 1, kind: input, shape index: {}]
  %s2 = inlined_call_operand.vmem [shape: f32[1,128], index: 2, kind: input, shape index: {}]
  %s3 = inlined_call_operand.vmem [shape: bf16[128,128], index: 3, kind: input, shape index: {}]
  %s4 = inlined_call_operand.vmem [shape: f32[1,128], index: 4, kind: input, shape index: {}]
  %s5 = inlined_call_operand.vmem [shape: bf16[128,8], index: 5, kind: input, shape index: {}]
  %s6 = inlined_call_operand.vmem [shape: f32[1,8], index: 6, kind: input, shape index: {}]
  %s7 = inlined_call_operand.vmem [shape: f32[1024,8], index: 7, kind: output, shape index: {}]
  %s8 = sld [smem:[#allocation0]]
  $region61: #{tpu_custom_call.1} parent=0
    _
  %s10 = ssub.s32 1, %s8
  %s11 = scalar_select 0, %s10, %s8
  loop: start=0, step=1, limit=4
  $region2: #{tpu_custom_call.1} parent=0 // loop_pre_header
    _
  $region3: #{tpu_custom_call.1} parent=0 // loop_header
    %s13 = sphi 0, %s17
    %p14 = scmp.ge.s32.totalorder %s13, 4
    %s23 = sphi 0, %s25
    %s26 = sphi 0, %s23
    %s27 = sphi 0, %s26
    %s43 = sphi 0, %s27
    %s47 = sphi 0, %s47
    %s49 = sphi 0, %s47
    %s50 = sphi 0, %s49
    %s64 = sphi 0, %s50
    %s68 = sphi 0, %s68
    %s70 = sphi 0, %s68
    %s71 = sphi 0, %s70
    %s85 = sphi 0, %s71
    %s89 = sphi 0, %s89
    %s91 = sphi 0, %s89
    %s92 = sphi 0, %s91
    %s106 = sphi 0, %s92
    %s110 = sphi 0, %s110
    %s112 = sphi 0, %s110
    %s113 = sphi 0, %s112
    %s127 = sphi 0, %s113
    %s131 = sphi 0, %s131
    %s133 = sphi 0, %s131
    %s134 = sphi 0, %s133
    %s148 = sphi 0, %s134
    %s152 = sphi 0, %s152
    %s154 = sphi 0, %s152
    %s155 = sphi 0, %s154
    %s169 = sphi 0, %s155
    %s175 = sphi 0, %s177
    %s178 = sphi 0, %s175
    %s179 = sphi 0, %s178
    %s195 = sphi 0, %s179
  $region4: #{tpu_custom_call.1} parent=0 // loop_header_branch
    %16 = sbr.rel (%p14) target = $region8
  $region5: #{tpu_custom_call.1} parent=0 // loop_body
    %s18 = ssub.s32 %s13, 1
    %s19 = ssub.s32 %s13, 2
    %s20 = sadd.s32 %s13, 1
    %s21 = ssub.s32 %s13, %s20
    %p22 = scmp.eq.s32.totalorder %s21, 0
    %s24 = sadd.s32 %s23, 1
    %s25 = scalar_select %p22, %s23, %s24
    %p28 = pneg %p22
    %p29 = scmp.eq.s32.totalorder %s13, 1
    %p30 = por %p28, %p29
    %p31 = scmp.ne.s32.totalorder %s23, %s26
    %p32 = scmp.eq.s32.totalorder %s13, 0
    %p33 = por %p31, %p32
    %p34 = scmp.ne.s32.totalorder %s23, %s26
    %p35 = scmp.eq.s32.totalorder %s18, 1
    %p36 = por %p34, %p35
    %p37 = scmp.ne.s32.totalorder %s26, %s27
    %p38 = scmp.eq.s32.totalorder %s18, 0
    %p39 = por %p37, %p38
    %p40 = scmp.ne.s32.totalorder %s26, %s27
    %p41 = scmp.eq.s32.totalorder %s19, 1
    %p42 = por %p40, %p41
    %p44 = scmp.ne.s32.totalorder %s27, %s43
    %p45 = scmp.eq.s32.totalorder %s19, 0
    %p46 = por %p44, %p45
    %s48 = sadd.s32 %s47, 1
    %p51 = scmp.eq.s32.totalorder %s13, 1
    %p52 = scmp.ne.s32.totalorder %s47, %s49
    %p53 = scmp.eq.s32.totalorder %s13, 0
    %p54 = por %p52, %p53
    %p55 = scmp.ne.s32.totalorder %s47, %s49
    %p56 = scmp.eq.s32.totalorder %s18, 1
    %p57 = por %p55, %p56
    %p58 = scmp.ne.s32.totalorder %s49, %s50
    %p59 = scmp.eq.s32.totalorder %s18, 0
    %p60 = por %p58, %p59
    %p61 = scmp.ne.s32.totalorder %s49, %s50
    %p62 = scmp.eq.s32.totalorder %s19, 1
    %p63 = por %p61, %p62
    %p65 = scmp.ne.s32.totalorder %s50, %s64
    %p66 = scmp.eq.s32.totalorder %s19, 0
    %p67 = por %p65, %p66
    %s69 = sadd.s32 %s68, 1
    %p72 = scmp.eq.s32.totalorder %s13, 1
    %p73 = scmp.ne.s32.totalorder %s68, %s70
    %p74 = scmp.eq.s32.totalorder %s13, 0
    %p75 = por %p73, %p74
    %p76 = scmp.ne.s32.totalorder %s68, %s70
    %p77 = scmp.eq.s32.totalorder %s18, 1
    %p78 = por %p76, %p77
    %p79 = scmp.ne.s32.totalorder %s70, %s71
    %p80 = scmp.eq.s32.totalorder %s18, 0
    %p81 = por %p79, %p80
    %p82 = scmp.ne.s32.totalorder %s70, %s71
    %p83 = scmp.eq.s32.totalorder %s19, 1
    %p84 = por %p82, %p83
    %p86 = scmp.ne.s32.totalorder %s71, %s85
    %p87 = scmp.eq.s32.totalorder %s19, 0
    %p88 = por %p86, %p87
    %s90 = sadd.s32 %s89, 1
    %p93 = scmp.eq.s32.totalorder %s13, 1
    %p94 = scmp.ne.s32.totalorder %s89, %s91
    %p95 = scmp.eq.s32.totalorder %s13, 0
    %p96 = por %p94, %p95
    %p97 = scmp.ne.s32.totalorder %s89, %s91
    %p98 = scmp.eq.s32.totalorder %s18, 1
    %p99 = por %p97, %p98
    %p100 = scmp.ne.s32.totalorder %s91, %s92
    %p101 = scmp.eq.s32.totalorder %s18, 0
    %p102 = por %p100, %p101
    %p103 = scmp.ne.s32.totalorder %s91, %s92
    %p104 = scmp.eq.s32.totalorder %s19, 1
    %p105 = por %p103, %p104
    %p107 = scmp.ne.s32.totalorder %s92, %s106
    %p108 = scmp.eq.s32.totalorder %s19, 0
    %p109 = por %p107, %p108
    %s111 = sadd.s32 %s110, 1
    %p114 = scmp.eq.s32.totalorder %s13, 1
    %p115 = scmp.ne.s32.totalorder %s110, %s112
    %p116 = scmp.eq.s32.totalorder %s13, 0
    %p117 = por %p115, %p116
    %p118 = scmp.ne.s32.totalorder %s110, %s112
    %p119 = scmp.eq.s32.totalorder %s18, 1
    %p120 = por %p118, %p119
    %p121 = scmp.ne.s32.totalorder %s112, %s113
    %p122 = scmp.eq.s32.totalorder %s18, 0
    %p123 = por %p121, %p122
    %p124 = scmp.ne.s32.totalorder %s112, %s113
    %p125 = scmp.eq.s32.totalorder %s19, 1
    %p126 = por %p124, %p125
    %p128 = scmp.ne.s32.totalorder %s113, %s127
    %p129 = scmp.eq.s32.totalorder %s19, 0
    %p130 = por %p128, %p129
    %s132 = sadd.s32 %s131, 1
    %p135 = scmp.eq.s32.totalorder %s13, 1
    %p136 = scmp.ne.s32.totalorder %s131, %s133
    %p137 = scmp.eq.s32.totalorder %s13, 0
    %p138 = por %p136, %p137
    %p139 = scmp.ne.s32.totalorder %s131, %s133
    %p140 = scmp.eq.s32.totalorder %s18, 1
    %p141 = por %p139, %p140
    %p142 = scmp.ne.s32.totalorder %s133, %s134
    %p143 = scmp.eq.s32.totalorder %s18, 0
    %p144 = por %p142, %p143
    %p145 = scmp.ne.s32.totalorder %s133, %s134
    %p146 = scmp.eq.s32.totalorder %s19, 1
    %p147 = por %p145, %p146
    %p149 = scmp.ne.s32.totalorder %s134, %s148
    %p150 = scmp.eq.s32.totalorder %s19, 0
    %p151 = por %p149, %p150
    %s153 = sadd.s32 %s152, 1
    %p156 = scmp.eq.s32.totalorder %s13, 1
    %p157 = scmp.ne.s32.totalorder %s152, %s154
    %p158 = scmp.eq.s32.totalorder %s13, 0
    %p159 = por %p157, %p158
    %p160 = scmp.ne.s32.totalorder %s152, %s154
    %p161 = scmp.eq.s32.totalorder %s18, 1
    %p162 = por %p160, %p161
    %p163 = scmp.ne.s32.totalorder %s154, %s155
    %p164 = scmp.eq.s32.totalorder %s18, 0
    %p165 = por %p163, %p164
    %p166 = scmp.ne.s32.totalorder %s154, %s155
    %p167 = scmp.eq.s32.totalorder %s19, 1
    %p168 = por %p166, %p167
    %p170 = scmp.ne.s32.totalorder %s155, %s169
    %p171 = scmp.eq.s32.totalorder %s19, 0
    %p172 = por %p170, %p171
    %s173 = ssub.s32 %s13, %s20
    %p174 = scmp.eq.s32.totalorder %s173, 0
    %s176 = sadd.s32 %s175, 1
    %s177 = scalar_select %p174, %s175, %s176
    %p180 = pneg %p174
    %p181 = scmp.eq.s32.totalorder %s13, 1
    %p182 = por %p180, %p181
    %p183 = scmp.ne.s32.totalorder %s175, %s178
    %p184 = scmp.eq.s32.totalorder %s13, 0
    %p185 = por %p183, %p184
    %p186 = scmp.ne.s32.totalorder %s175, %s178
    %p187 = scmp.eq.s32.totalorder %s18, 1
    %p188 = por %p186, %p187
    %p189 = scmp.ne.s32.totalorder %s178, %s179
    %p190 = scmp.eq.s32.totalorder %s18, 0
    %p191 = por %p189, %p190
    %p192 = scmp.ne.s32.totalorder %s178, %s179
    %p193 = scmp.eq.s32.totalorder %s19, 1
    %p194 = por %p192, %p193
    %p196 = scmp.ne.s32.totalorder %s179, %s195
    %p197 = scmp.eq.s32.totalorder %s19, 0
    %p198 = por %p196, %p197
    %p199 = scmp.le.s32.totalorder 1, %s13
    %p200 = scmp.lt.s32.totalorder %s13, 3
    %p201 = pnand %p199, %p200
    %p202 = pneg %p201
    // Predicated region
    $region9: #{tpu_custom_call.1} parent=5 // pred_check
      _
    $region10: #{tpu_custom_call.1} parent=5 // pred_check_branch
      %204 = sbr.rel (%p201) target = $region12
    $region11: #{tpu_custom_call.1} parent=5 // pred_region
      %s205 = ssub.s32 %s13, 1
      // Predicated region
      $region13: #{tpu_custom_call.1} parent=11 // pred_check
        %p206 = pneg %p60
      $region14: #{tpu_custom_call.1} parent=11 // pred_check_branch
        %208 = sbr.rel (%p206) target = $region16
      $region15: #{tpu_custom_call.1} parent=11 // pred_region
        _
      $region16: #{tpu_custom_call.1} parent=11 // pred_fallthru
        _
      // Predicated region
      $region17: #{tpu_custom_call.1} parent=11 // pred_check
        %p209 = pneg %p81
      $region18: #{tpu_custom_call.1} parent=11 // pred_check_branch
        %211 = sbr.rel (%p209) target = $region20
      $region19: #{tpu_custom_call.1} parent=11 // pred_region
        _
      $region20: #{tpu_custom_call.1} parent=11 // pred_fallthru
        _
      // Predicated region
      $region21: #{tpu_custom_call.1} parent=11 // pred_check
        %p212 = pneg %p102
      $region22: #{tpu_custom_call.1} parent=11 // pred_check_branch
        %214 = sbr.rel (%p212) target = $region24
      $region23: #{tpu_custom_call.1} parent=11 // pred_region
        _
      $region24: #{tpu_custom_call.1} parent=11 // pred_fallthru
        _
      // Predicated region
      $region25: #{tpu_custom_call.1} parent=11 // pred_check
        %p215 = pneg %p123
      $region26: #{tpu_custom_call.1} parent=11 // pred_check_branch
        %217 = sbr.rel (%p215) target = $region28
      $region27: #{tpu_custom_call.1} parent=11 // pred_region
        _
      $region28: #{tpu_custom_call.1} parent=11 // pred_fallthru
        _
      // Predicated region
      $region29: #{tpu_custom_call.1} parent=11 // pred_check
        %p218 = pneg %p144
      $region30: #{tpu_custom_call.1} parent=11 // pred_check_branch
        %220 = sbr.rel (%p218) target = $region32
      $region31: #{tpu_custom_call.1} parent=11 // pred_region
        _
      $region32: #{tpu_custom_call.1} parent=11 // pred_fallthru
        _
      // Predicated region
      $region33: #{tpu_custom_call.1} parent=11 // pred_check
        %p221 = pneg %p165
      $region34: #{tpu_custom_call.1} parent=11 // pred_check_branch
        %223 = sbr.rel (%p221) target = $region36
      $region35: #{tpu_custom_call.1} parent=11 // pred_region
        _
      $region36: #{tpu_custom_call.1} parent=11 // pred_fallthru
        _
    $region12: #{tpu_custom_call.1} parent=5 // pred_fallthru
      _
    %p224 = scmp.lt.s32.totalorder %s13, 2
    // Predicated region
    $region37: #{tpu_custom_call.1} parent=5 // pred_check
      %p225 = pneg %p224
    $region38: #{tpu_custom_call.1} parent=5 // pred_check_branch
      %227 = sbr.rel (%p225) target = $region40
    $region39: #{tpu_custom_call.1} parent=5 // pred_region
      // Predicated region
      $region41: #{tpu_custom_call.1} parent=39 // pred_check
        %p228 = pneg %p33
      $region42: #{tpu_custom_call.1} parent=39 // pred_check_branch
        %230 = sbr.rel (%p228) target = $region44
      $region43: #{tpu_custom_call.1} parent=39 // pred_region
        %s231 = smul.u32 64, %s13
        %p232 = scmp.lt.s32.totalorder %s231, 127
        %s233 = scalar_select %p232, %s231, 127
        %s234 = smul.addr %s233, 4
        %s235 = scalar_lea.vmem %s0, %s234
        %s236 = smul.u32 64, %s13
      $region44: #{tpu_custom_call.1} parent=39 // pred_fallthru
        _
    $region40: #{tpu_custom_call.1} parent=5 // pred_fallthru
      _
    %p237 = scmp.le.s32.totalorder 1, %s13
    %p238 = scmp.lt.s32.totalorder %s13, 3
    %p239 = pnand %p237, %p238
    %p240 = pneg %p239
    // Predicated region
    $region45: #{tpu_custom_call.1} parent=5 // pred_check
      _
    $region46: #{tpu_custom_call.1} parent=5 // pred_check_branch
      %242 = sbr.rel (%p239) target = $region48
    $region47: #{tpu_custom_call.1} parent=5 // pred_region
      %s243 = ssub.s32 %s13, 1
      %s244 = smul.u32 64, %s18
      %p245 = scmp.lt.s32.totalorder %s244, 127
      %s246 = scalar_select %p245, %s244, 127
      %s247 = smul.addr %s246, 4
      %s248 = scalar_lea.vmem %s0, %s247
      %p249 = pneg %p39
      %p250 = pneg %p36
      %p251 = pneg %p60
      %p252 = pneg %p57
      %p253 = pneg %p81
      %p254 = pneg %p78
      %p255 = pneg %p102
      %p256 = pneg %p99
      %p257 = pneg %p123
      %p258 = pneg %p120
      %p259 = pneg %p144
      %p260 = pneg %p141
      %p261 = pneg %p165
      %p262 = pneg %p162
      %p263 = pneg %p191
      %p264 = pneg %p188
      %s265 = smul.u32 64, %s18
      %p266 = scmp.lt.s32.totalorder %s265, 127
      %s267 = scalar_select %p266, %s265, 127
      %s268 = smul.addr %s267, 8
      %s269 = scalar_lea.vmem %s7, %s268
      %s270 = smul.u32 64, %s18
      %p271 = scmp.lt.s32.totalorder %s270, 127
      %s272 = scalar_select %p271, %s270, 127
      %s273 = smul.addr %s272, 4
      %s274 = scalar_lea.vmem %s0, %s273
      %s275 = smul.u32 64, %s18
      %s276 = smul.u32 64, %s18
      %p277 = scmp.lt.s32.totalorder %s276, 127
      %s278 = scalar_select %p277, %s276, 127
      %s279 = smul.addr %s278, 8
      %s280 = scalar_lea.vmem %s7, %s279
      %s281 = smul.u32 64, %s18
      %v283 = vld [vmem:[%s274] sm:$0xf]
      %v284 = vld [vmem:[%s274 + $0x4] sm:$0xf]
      %v285 = vld [vmem:[%s274 + $0x8] sm:$0xf]
      %v286 = vld [vmem:[%s274 + $0xc] sm:$0xf]
      %v287 = vld [vmem:[%s274 + $0x10] sm:$0xf]
      %v288 = vld [vmem:[%s274 + $0x14] sm:$0xf]
      %v289 = vld [vmem:[%s274 + $0x18] sm:$0xf]
      %v290 = vld [vmem:[%s274 + $0x1c] sm:$0xf]
      %v291 = vld [vmem:[%s274 + $0x20] sm:$0xf]
      %v292 = vld [vmem:[%s274 + $0x24] sm:$0xf]
      %v293 = vld [vmem:[%s274 + $0x28] sm:$0xf]
      %v294 = vld [vmem:[%s274 + $0x2c] sm:$0xf]
      %v295 = vld [vmem:[%s274 + $0x30] sm:$0xf]
      %v296 = vld [vmem:[%s274 + $0x34] sm:$0xf]
      %v297 = vld [vmem:[%s274 + $0x38] sm:$0xf]
      %v298 = vld [vmem:[%s274 + $0x3c] sm:$0xf]
      %v299 = vld [vmem:[%s274 + $0x40] sm:$0xf]
      %v300 = vld [vmem:[%s274 + $0x44] sm:$0xf]
      %v301 = vld [vmem:[%s274 + $0x48] sm:$0xf]
      %v302 = vld [vmem:[%s274 + $0x4c] sm:$0xf]
      %v303 = vld [vmem:[%s274 + $0x50] sm:$0xf]
      %v304 = vld [vmem:[%s274 + $0x54] sm:$0xf]
      %v305 = vld [vmem:[%s274 + $0x58] sm:$0xf]
      %v306 = vld [vmem:[%s274 + $0x5c] sm:$0xf]
      %v307 = vld [vmem:[%s274 + $0x60] sm:$0xf]
      %v308 = vld [vmem:[%s274 + $0x64] sm:$0xf]
      %v309 = vld [vmem:[%s274 + $0x68] sm:$0xf]
      %v310 = vld [vmem:[%s274 + $0x6c] sm:$0xf]
      %v311 = vld [vmem:[%s274 + $0x70] sm:$0xf]
      %v312 = vld [vmem:[%s274 + $0x74] sm:$0xf]
      %v313 = vld [vmem:[%s274 + $0x78] sm:$0xf]
      %v314 = vld [vmem:[%s274 + $0x7c] sm:$0xf]
      %v315 = vld [vmem:[%s274 + $0x80] sm:$0xf]
      %v316 = vld [vmem:[%s274 + $0x84] sm:$0xf]
      %v317 = vld [vmem:[%s274 + $0x88] sm:$0xf]
      %v318 = vld [vmem:[%s274 + $0x8c] sm:$0xf]
      %v319 = vld [vmem:[%s274 + $0x90] sm:$0xf]
      %v320 = vld [vmem:[%s274 + $0x94] sm:$0xf]
      %v321 = vld [vmem:[%s274 + $0x98] sm:$0xf]
      %v322 = vld [vmem:[%s274 + $0x9c] sm:$0xf]
      %v323 = vld [vmem:[%s274 + $0xa0] sm:$0xf]
      %v324 = vld [vmem:[%s274 + $0xa4] sm:$0xf]
      %v325 = vld [vmem:[%s274 + $0xa8] sm:$0xf]
      %v326 = vld [vmem:[%s274 + $0xac] sm:$0xf]
      %v327 = vld [vmem:[%s274 + $0xb0] sm:$0xf]
      %v328 = vld [vmem:[%s274 + $0xb4] sm:$0xf]
      %v329 = vld [vmem:[%s274 + $0xb8] sm:$0xf]
      %v330 = vld [vmem:[%s274 + $0xbc] sm:$0xf]
      %v331 = vld [vmem:[%s274 + $0xc0] sm:$0xf]
      %v332 = vld [vmem:[%s274 + $0xc4] sm:$0xf]
      %v333 = vld [vmem:[%s274 + $0xc8] sm:$0xf]
      %v334 = vld [vmem:[%s274 + $0xcc] sm:$0xf]
      %v335 = vld [vmem:[%s274 + $0xd0] sm:$0xf]
      %v336 = vld [vmem:[%s274 + $0xd4] sm:$0xf]
      %v337 = vld [vmem:[%s274 + $0xd8] sm:$0xf]
      %v338 = vld [vmem:[%s274 + $0xdc] sm:$0xf]
      %v339 = vld [vmem:[%s274 + $0xe0] sm:$0xf]
      %v340 = vld [vmem:[%s274 + $0xe4] sm:$0xf]
      %v341 = vld [vmem:[%s274 + $0xe8] sm:$0xf]
      %v342 = vld [vmem:[%s274 + $0xec] sm:$0xf]
      %v343 = vld [vmem:[%s274 + $0xf0] sm:$0xf]
      %v344 = vld [vmem:[%s274 + $0xf4] sm:$0xf]
      %v345 = vld [vmem:[%s274 + $0xf8] sm:$0xf]
      %v346 = vld [vmem:[%s274 + $0xfc] sm:$0xf]
      %v347 = vld [vmem:[%s1] sm:$0xf]
      %v348 = vld [vmem:[%s2] sm:$0x1]
      %v350 = vperm.slane %v348, 0
      %v416 = vunpack.c.l.b16 %v283
      %v417 = vunpack.c.l.b16 %v284
      %v418 = vunpack.c.l.b16 %v285
      %v419 = vunpack.c.l.b16 %v286
      %v420 = vunpack.c.l.b16 %v287
      %v421 = vunpack.c.l.b16 %v288
      %v422 = vunpack.c.l.b16 %v289
      %v423 = vunpack.c.l.b16 %v290
      %v424 = vunpack.c.l.b16 %v291
      %v425 = vunpack.c.l.b16 %v292
      %v426 = vunpack.c.l.b16 %v293
      %v427 = vunpack.c.l.b16 %v294
      %v428 = vunpack.c.l.b16 %v295
      %v429 = vunpack.c.l.b16 %v296
      %v430 = vunpack.c.l.b16 %v297
      %v431 = vunpack.c.l.b16 %v298
      %v432 = vunpack.c.l.b16 %v299
      %v433 = vunpack.c.l.b16 %v300
      %v434 = vunpack.c.l.b16 %v301
      %v435 = vunpack.c.l.b16 %v302
      %v436 = vunpack.c.l.b16 %v303
      %v437 = vunpack.c.l.b16 %v304
      %v438 = vunpack.c.l.b16 %v305
      %v439 = vunpack.c.l.b16 %v306
      %v440 = vunpack.c.l.b16 %v307
      %v441 = vunpack.c.l.b16 %v308
      %v442 = vunpack.c.l.b16 %v309
      %v443 = vunpack.c.l.b16 %v310
      %v444 = vunpack.c.l.b16 %v311
      %v445 = vunpack.c.l.b16 %v312
      %v446 = vunpack.c.l.b16 %v313
      %v447 = vunpack.c.l.b16 %v314
      %v448 = vunpack.c.l.b16 %v315
      %v449 = vunpack.c.l.b16 %v316
      %v450 = vunpack.c.l.b16 %v317
      %v451 = vunpack.c.l.b16 %v318
      %v452 = vunpack.c.l.b16 %v319
      %v453 = vunpack.c.l.b16 %v320
      %v454 = vunpack.c.l.b16 %v321
      %v455 = vunpack.c.l.b16 %v322
      %v456 = vunpack.c.l.b16 %v323
      %v457 = vunpack.c.l.b16 %v324
      %v458 = vunpack.c.l.b16 %v325
      %v459 = vunpack.c.l.b16 %v326
      %v460 = vunpack.c.l.b16 %v327
      %v461 = vunpack.c.l.b16 %v328
      %v462 = vunpack.c.l.b16 %v329
      %v463 = vunpack.c.l.b16 %v330
      %v464 = vunpack.c.l.b16 %v331
      %v465 = vunpack.c.l.b16 %v332
      %v466 = vunpack.c.l.b16 %v333
      %v467 = vunpack.c.l.b16 %v334
      %v468 = vunpack.c.l.b16 %v335
      %v469 = vunpack.c.l.b16 %v336
      %v470 = vunpack.c.l.b16 %v337
      %v471 = vunpack.c.l.b16 %v338
      %v472 = vunpack.c.l.b16 %v339
      %v473 = vunpack.c.l.b16 %v340
      %v474 = vunpack.c.l.b16 %v341
      %v475 = vunpack.c.l.b16 %v342
      %v476 = vunpack.c.l.b16 %v343
      %v477 = vunpack.c.l.b16 %v344
      %v478 = vunpack.c.l.b16 %v345
      %v479 = vunpack.c.l.b16 %v346
      %v480 = vpack.c.b16 %v417, %v416
      %v481 = vpack.c.b16 %v419, %v418
      %v482 = vpack.c.b16 %v421, %v420
      %v483 = vpack.c.b16 %v423, %v422
      %v484 = vpack.c.b16 %v425, %v424
      %v485 = vpack.c.b16 %v427, %v426
      %v486 = vpack.c.b16 %v429, %v428
      %v487 = vpack.c.b16 %v431, %v430
      %v488 = vpack.c.b16 %v433, %v432
      %v489 = vpack.c.b16 %v435, %v434
      %v490 = vpack.c.b16 %v437, %v436
      %v491 = vpack.c.b16 %v439, %v438
      %v492 = vpack.c.b16 %v441, %v440
      %v493 = vpack.c.b16 %v443, %v442
      %v494 = vpack.c.b16 %v445, %v444
      %v495 = vpack.c.b16 %v447, %v446
      %v496 = vpack.c.b16 %v449, %v448
      %v497 = vpack.c.b16 %v451, %v450
      %v498 = vpack.c.b16 %v453, %v452
      %v499 = vpack.c.b16 %v455, %v454
      %v500 = vpack.c.b16 %v457, %v456
      %v501 = vpack.c.b16 %v459, %v458
      %v502 = vpack.c.b16 %v461, %v460
      %v503 = vpack.c.b16 %v463, %v462
      %v504 = vpack.c.b16 %v465, %v464
      %v505 = vpack.c.b16 %v467, %v466
      %v506 = vpack.c.b16 %v469, %v468
      %v507 = vpack.c.b16 %v471, %v470
      %v508 = vpack.c.b16 %v473, %v472
      %v509 = vpack.c.b16 %v475, %v474
      %v510 = vpack.c.b16 %v477, %v476
      %v511 = vpack.c.b16 %v479, %v478
      %vm512 = vcmask 64512
      %v514 = vsel %vm512, %v480, 0
      %v517 = vsel %vm512, %v481, 0
      %v520 = vsel %vm512, %v482, 0
      %v523 = vsel %vm512, %v483, 0
      %v526 = vsel %vm512, %v484, 0
      %v529 = vsel %vm512, %v485, 0
      %v532 = vsel %vm512, %v486, 0
      %v535 = vsel %vm512, %v487, 0
      %v538 = vsel %vm512, %v488, 0
      %v541 = vsel %vm512, %v489, 0
      %v544 = vsel %vm512, %v490, 0
      %v547 = vsel %vm512, %v491, 0
      %v550 = vsel %vm512, %v492, 0
      %v553 = vsel %vm512, %v493, 0
      %v556 = vsel %vm512, %v494, 0
      %v559 = vsel %vm512, %v495, 0
      %v562 = vsel %vm512, %v496, 0
      %v565 = vsel %vm512, %v497, 0
      %v568 = vsel %vm512, %v498, 0
      %v571 = vsel %vm512, %v499, 0
      %v574 = vsel %vm512, %v500, 0
      %v577 = vsel %vm512, %v501, 0
      %v580 = vsel %vm512, %v502, 0
      %v583 = vsel %vm512, %v503, 0
      %v586 = vsel %vm512, %v504, 0
      %v589 = vsel %vm512, %v505, 0
      %v592 = vsel %vm512, %v506, 0
      %v595 = vsel %vm512, %v507, 0
      %v598 = vsel %vm512, %v508, 0
      %v601 = vsel %vm512, %v509, 0
      %v604 = vsel %vm512, %v510, 0
      %v607 = vsel %vm512, %v511, 0
      %vm609 = vcmask 1043456
      %v611 = vsel %vm609, %v347, 0
      %613 = vmatpush.bf16.msra.mxu0 0
      %614 = vmatpush.bf16.msra.mxu0 0
      %615 = vmatpush.bf16.msra.mxu0 0
      %616 = vmatpush.bf16.msra.mxu0 0
      %617 = vmatpush.bf16.msra.mxu0 0
      %618 = vmatpush.bf16.msra.mxu0 0
      %619 = vmatpush.bf16.msra.mxu0 0
      %620 = vmatpush.bf16.msra.mxu0 %v611
      %621 = vmatmul.bf16.gmra.mxu0 %v514
      %v622 = vpop.f32.mrf.mxu0
      %v623 = vadd.f32 %v350, %v622
      %v624 = vpop.f32.mrf.mxu0
      %v625 = vadd.f32 %v350, %v624
      %626 = vmatmul.bf16.gmra.mxu0 %v517
      %v627 = vpop.f32.mrf.mxu0
      %v628 = vadd.f32 %v350, %v627
      %v629 = vpop.f32.mrf.mxu0
      %v630 = vadd.f32 %v350, %v629
      %631 = vmatmul.bf16.gmra.mxu0 %v520
      %v632 = vpop.f32.mrf.mxu0
      %v633 = vadd.f32 %v350, %v632
      %v634 = vpop.f32.mrf.mxu0
      %v635 = vadd.f32 %v350, %v634
      %636 = vmatmul.bf16.gmra.mxu0 %v523
      %v637 = vpop.f32.mrf.mxu0
      %v638 = vadd.f32 %v350, %v637
      %v639 = vpop.f32.mrf.mxu0
      %v640 = vadd.f32 %v350, %v639
      %641 = vmatmul.bf16.gmra.mxu0 %v526
      %v642 = vpop.f32.mrf.mxu0
      %v643 = vadd.f32 %v350, %v642
      %v644 = vpop.f32.mrf.mxu0
      %v645 = vadd.f32 %v350, %v644
      %646 = vmatmul.bf16.gmra.mxu0 %v529
      %v647 = vpop.f32.mrf.mxu0
      %v648 = vadd.f32 %v350, %v647
      %v649 = vpop.f32.mrf.mxu0
      %v650 = vadd.f32 %v350, %v649
      %651 = vmatmul.bf16.gmra.mxu0 %v532
      %v652 = vpop.f32.mrf.mxu0
      %v653 = vadd.f32 %v350, %v652
      %v654 = vpop.f32.mrf.mxu0
      %v655 = vadd.f32 %v350, %v654
      %656 = vmatmul.bf16.gmra.mxu0 %v535
      %v657 = vpop.f32.mrf.mxu0
      %v658 = vadd.f32 %v350, %v657
      %v659 = vpop.f32.mrf.mxu0
      %v660 = vadd.f32 %v350, %v659
      %661 = vmatmul.bf16.gmra.mxu0 %v538
      %v662 = vpop.f32.mrf.mxu0
      %v663 = vadd.f32 %v350, %v662
      %v664 = vpop.f32.mrf.mxu0
      %v665 = vadd.f32 %v350, %v664
      %666 = vmatmul.bf16.gmra.mxu0 %v541
      %v667 = vpop.f32.mrf.mxu0
      %v668 = vadd.f32 %v350, %v667
      %v669 = vpop.f32.mrf.mxu0
      %v670 = vadd.f32 %v350, %v669
      %671 = vmatmul.bf16.gmra.mxu0 %v544
      %v672 = vpop.f32.mrf.mxu0
      %v673 = vadd.f32 %v350, %v672
      %v674 = vpop.f32.mrf.mxu0
      %v675 = vadd.f32 %v350, %v674
      %676 = vmatmul.bf16.gmra.mxu0 %v547
      %v677 = vpop.f32.mrf.mxu0
      %v678 = vadd.f32 %v350, %v677
      %v679 = vpop.f32.mrf.mxu0
      %v680 = vadd.f32 %v350, %v679
      %681 = vmatmul.bf16.gmra.mxu0 %v550
      %v682 = vpop.f32.mrf.mxu0
      %v683 = vadd.f32 %v350, %v682
      %v684 = vpop.f32.mrf.mxu0
      %v685 = vadd.f32 %v350, %v684
      %686 = vmatmul.bf16.gmra.mxu0 %v553
      %v687 = vpop.f32.mrf.mxu0
      %v688 = vadd.f32 %v350, %v687
      %v689 = vpop.f32.mrf.mxu0
      %v690 = vadd.f32 %v350, %v689
      %691 = vmatmul.bf16.gmra.mxu0 %v556
      %v692 = vpop.f32.mrf.mxu0
      %v693 = vadd.f32 %v350, %v692
      %v694 = vpop.f32.mrf.mxu0
      %v695 = vadd.f32 %v350, %v694
      %696 = vmatmul.bf16.gmra.mxu0 %v559
      %v697 = vpop.f32.mrf.mxu0
      %v698 = vadd.f32 %v350, %v697
      %v699 = vpop.f32.mrf.mxu0
      %v700 = vadd.f32 %v350, %v699
      %701 = vmatmul.bf16.gmra.mxu0 %v562
      %v702 = vpop.f32.mrf.mxu0
      %v703 = vadd.f32 %v350, %v702
      %v704 = vpop.f32.mrf.mxu0
      %v705 = vadd.f32 %v350, %v704
      %706 = vmatmul.bf16.gmra.mxu0 %v565
      %v707 = vpop.f32.mrf.mxu0
      %v708 = vadd.f32 %v350, %v707
      %v709 = vpop.f32.mrf.mxu0
      %v710 = vadd.f32 %v350, %v709
      %711 = vmatmul.bf16.gmra.mxu0 %v568
      %v712 = vpop.f32.mrf.mxu0
      %v713 = vadd.f32 %v350, %v712
      %v714 = vpop.f32.mrf.mxu0
      %v715 = vadd.f32 %v350, %v714
      %716 = vmatmul.bf16.gmra.mxu0 %v571
      %v717 = vpop.f32.mrf.mxu0
      %v718 = vadd.f32 %v350, %v717
      %v719 = vpop.f32.mrf.mxu0
      %v720 = vadd.f32 %v350, %v719
      %721 = vmatmul.bf16.gmra.mxu0 %v574
      %v722 = vpop.f32.mrf.mxu0
      %v723 = vadd.f32 %v350, %v722
      %v724 = vpop.f32.mrf.mxu0
      %v725 = vadd.f32 %v350, %v724
      %726 = vmatmul.bf16.gmra.mxu0 %v577
      %v727 = vpop.f32.mrf.mxu0
      %v728 = vadd.f32 %v350, %v727
      %v729 = vpop.f32.mrf.mxu0
      %v730 = vadd.f32 %v350, %v729
      %731 = vmatmul.bf16.gmra.mxu0 %v580
      %v732 = vpop.f32.mrf.mxu0
      %v733 = vadd.f32 %v350, %v732
      %v734 = vpop.f32.mrf.mxu0
      %v735 = vadd.f32 %v350, %v734
      %736 = vmatmul.bf16.gmra.mxu0 %v583
      %v737 = vpop.f32.mrf.mxu0
      %v738 = vadd.f32 %v350, %v737
      %v739 = vpop.f32.mrf.mxu0
      %v740 = vadd.f32 %v350, %v739
      %741 = vmatmul.bf16.gmra.mxu0 %v586
      %v742 = vpop.f32.mrf.mxu0
      %v743 = vadd.f32 %v350, %v742
      %v744 = vpop.f32.mrf.mxu0
      %v745 = vadd.f32 %v350, %v744
      %746 = vmatmul.bf16.gmra.mxu0 %v589
      %v747 = vpop.f32.mrf.mxu0
      %v748 = vadd.f32 %v350, %v747
      %v749 = vpop.f32.mrf.mxu0
      %v750 = vadd.f32 %v350, %v749
      %751 = vmatmul.bf16.gmra.mxu0 %v592
      %v752 = vpop.f32.mrf.mxu0
      %v753 = vadd.f32 %v350, %v752
      %v754 = vpop.f32.mrf.mxu0
      %v755 = vadd.f32 %v350, %v754
      %756 = vmatmul.bf16.gmra.mxu0 %v595
      %v757 = vpop.f32.mrf.mxu0
      %v758 = vadd.f32 %v350, %v757
      %v759 = vpop.f32.mrf.mxu0
      %v760 = vadd.f32 %v350, %v759
      %761 = vmatmul.bf16.gmra.mxu0 %v598
      %v762 = vpop.f32.mrf.mxu0
      %v763 = vadd.f32 %v350, %v762
      %v764 = vpop.f32.mrf.mxu0
      %v765 = vadd.f32 %v350, %v764
      %766 = vmatmul.bf16.gmra.mxu0 %v601
      %v767 = vpop.f32.mrf.mxu0
      %v768 = vadd.f32 %v350, %v767
      %v769 = vpop.f32.mrf.mxu0
      %v770 = vadd.f32 %v350, %v769
      %771 = vmatmul.bf16.gmra.mxu0 %v604
      %v772 = vpop.f32.mrf.mxu0
      %v773 = vadd.f32 %v350, %v772
      %v774 = vpop.f32.mrf.mxu0
      %v775 = vadd.f32 %v350, %v774
      %776 = vmatmul.bf16.gmra.mxu0 %v607
      %v777 = vpop.f32.mrf.mxu0
      %v778 = vadd.f32 %v350, %v777
      %v779 = vpop.f32.mrf.mxu0
      %v780 = vadd.f32 %v350, %v779
      %781 = vdwg.mxu0
      %v782 = vmax.f32 %v623, 0.0
      %v783 = vmax.f32 %v625, 0.0
      %v784 = vmax.f32 %v628, 0.0
      %v785 = vmax.f32 %v630, 0.0
      %v786 = vmax.f32 %v633, 0.0
      %v787 = vmax.f32 %v635, 0.0
      %v788 = vmax.f32 %v638, 0.0
      %v789 = vmax.f32 %v640, 0.0
      %v790 = vmax.f32 %v643, 0.0
      %v791 = vmax.f32 %v645, 0.0
      %v792 = vmax.f32 %v648, 0.0
      %v793 = vmax.f32 %v650, 0.0
      %v794 = vmax.f32 %v653, 0.0
      %v795 = vmax.f32 %v655, 0.0
      %v796 = vmax.f32 %v658, 0.0
      %v797 = vmax.f32 %v660, 0.0
      %v798 = vmax.f32 %v663, 0.0
      %v799 = vmax.f32 %v665, 0.0
      %v800 = vmax.f32 %v668, 0.0
      %v801 = vmax.f32 %v670, 0.0
      %v802 = vmax.f32 %v673, 0.0
      %v803 = vmax.f32 %v675, 0.0
      %v804 = vmax.f32 %v678, 0.0
      %v805 = vmax.f32 %v680, 0.0
      %v806 = vmax.f32 %v683, 0.0
      %v807 = vmax.f32 %v685, 0.0
      %v808 = vmax.f32 %v688, 0.0
      %v809 = vmax.f32 %v690, 0.0
      %v810 = vmax.f32 %v693, 0.0
      %v811 = vmax.f32 %v695, 0.0
      %v812 = vmax.f32 %v698, 0.0
      %v813 = vmax.f32 %v700, 0.0
      %v814 = vmax.f32 %v703, 0.0
      %v815 = vmax.f32 %v705, 0.0
      %v816 = vmax.f32 %v708, 0.0
      %v817 = vmax.f32 %v710, 0.0
      %v818 = vmax.f32 %v713, 0.0
      %v819 = vmax.f32 %v715, 0.0
      %v820 = vmax.f32 %v718, 0.0
      %v821 = vmax.f32 %v720, 0.0
      %v822 = vmax.f32 %v723, 0.0
      %v823 = vmax.f32 %v725, 0.0
      %v824 = vmax.f32 %v728, 0.0
      %v825 = vmax.f32 %v730, 0.0
      %v826 = vmax.f32 %v733, 0.0
      %v827 = vmax.f32 %v735, 0.0
      %v828 = vmax.f32 %v738, 0.0
      %v829 = vmax.f32 %v740, 0.0
      %v830 = vmax.f32 %v743, 0.0
      %v831 = vmax.f32 %v745, 0.0
      %v832 = vmax.f32 %v748, 0.0
      %v833 = vmax.f32 %v750, 0.0
      %v834 = vmax.f32 %v753, 0.0
      %v835 = vmax.f32 %v755, 0.0
      %v836 = vmax.f32 %v758, 0.0
      %v837 = vmax.f32 %v760, 0.0
      %v838 = vmax.f32 %v763, 0.0
      %v839 = vmax.f32 %v765, 0.0
      %v840 = vmax.f32 %v768, 0.0
      %v841 = vmax.f32 %v770, 0.0
      %v842 = vmax.f32 %v773, 0.0
      %v843 = vmax.f32 %v775, 0.0
      %v844 = vmax.f32 %v778, 0.0
      %v845 = vmax.f32 %v780, 0.0
      %v846 = vpack.c.bf16 %v783, %v782
      %v847 = vpack.c.bf16 %v785, %v784
      %v848 = vpack.c.bf16 %v787, %v786
      %v849 = vpack.c.bf16 %v789, %v788
      %v850 = vpack.c.bf16 %v791, %v790
      %v851 = vpack.c.bf16 %v793, %v792
      %v852 = vpack.c.bf16 %v795, %v794
      %v853 = vpack.c.bf16 %v797, %v796
      %v854 = vpack.c.bf16 %v799, %v798
      %v855 = vpack.c.bf16 %v801, %v800
      %v856 = vpack.c.bf16 %v803, %v802
      %v857 = vpack.c.bf16 %v805, %v804
      %v858 = vpack.c.bf16 %v807, %v806
      %v859 = vpack.c.bf16 %v809, %v808
      %v860 = vpack.c.bf16 %v811, %v810
      %v861 = vpack.c.bf16 %v813, %v812
      %v862 = vpack.c.bf16 %v815, %v814
      %v863 = vpack.c.bf16 %v817, %v816
      %v864 = vpack.c.bf16 %v819, %v818
      %v865 = vpack.c.bf16 %v821, %v820
      %v866 = vpack.c.bf16 %v823, %v822
      %v867 = vpack.c.bf16 %v825, %v824
      %v868 = vpack.c.bf16 %v827, %v826
      %v869 = vpack.c.bf16 %v829, %v828
      %v870 = vpack.c.bf16 %v831, %v830
      %v871 = vpack.c.bf16 %v833, %v832
      %v872 = vpack.c.bf16 %v835, %v834
      %v873 = vpack.c.bf16 %v837, %v836
      %v874 = vpack.c.bf16 %v839, %v838
      %v875 = vpack.c.bf16 %v841, %v840
      %v876 = vpack.c.bf16 %v843, %v842
      %v877 = vpack.c.bf16 %v845, %v844
      %v878 = vld [vmem:[%s3] sm:$0xf]
      %v879 = vld [vmem:[%s3 + $0x4] sm:$0xf]
      %v880 = vld [vmem:[%s3 + $0x8] sm:$0xf]
      %v881 = vld [vmem:[%s3 + $0xc] sm:$0xf]
      %v882 = vld [vmem:[%s3 + $0x10] sm:$0xf]
      %v883 = vld [vmem:[%s3 + $0x14] sm:$0xf]
      %v884 = vld [vmem:[%s3 + $0x18] sm:$0xf]
      %v885 = vld [vmem:[%s3 + $0x1c] sm:$0xf]
      %v886 = vld [vmem:[%s3 + $0x20] sm:$0xf]
      %v887 = vld [vmem:[%s3 + $0x24] sm:$0xf]
      %v888 = vld [vmem:[%s3 + $0x28] sm:$0xf]
      %v889 = vld [vmem:[%s3 + $0x2c] sm:$0xf]
      %v890 = vld [vmem:[%s3 + $0x30] sm:$0xf]
      %v891 = vld [vmem:[%s3 + $0x34] sm:$0xf]
      %v892 = vld [vmem:[%s3 + $0x38] sm:$0xf]
      %v893 = vld [vmem:[%s3 + $0x3c] sm:$0xf]
      %v894 = vld [vmem:[%s4] sm:$0x1]
      %v896 = vperm.slane %v894, 0
      %v914 = vunpack.c.l.b16 %v878
      %v915 = vunpack.c.l.b16 %v879
      %v916 = vunpack.c.l.b16 %v880
      %v917 = vunpack.c.l.b16 %v881
      %v918 = vunpack.c.l.b16 %v882
      %v919 = vunpack.c.l.b16 %v883
      %v920 = vunpack.c.l.b16 %v884
      %v921 = vunpack.c.l.b16 %v885
      %v922 = vunpack.c.l.b16 %v886
      %v923 = vunpack.c.l.b16 %v887
      %v924 = vunpack.c.l.b16 %v888
      %v925 = vunpack.c.l.b16 %v889
      %v926 = vunpack.c.l.b16 %v890
      %v927 = vunpack.c.l.b16 %v891
      %v928 = vunpack.c.l.b16 %v892
      %v929 = vunpack.c.l.b16 %v893
      %v930 = vpack.c.b16 %v915, %v914
      %v931 = vpack.c.b16 %v917, %v916
      %v932 = vpack.c.b16 %v919, %v918
      %v933 = vpack.c.b16 %v921, %v920
      %v934 = vpack.c.b16 %v923, %v922
      %v935 = vpack.c.b16 %v925, %v924
      %v936 = vpack.c.b16 %v927, %v926
      %v937 = vpack.c.b16 %v929, %v928
      %946 = vmatpush.bf16.msra.mxu0 %v937
      %947 = vmatpush.bf16.msra.mxu0 %v936
      %948 = vmatpush.bf16.msra.mxu0 %v935
      %949 = vmatpush.bf16.msra.mxu0 %v934
      %950 = vmatpush.bf16.msra.mxu0 %v933
      %951 = vmatpush.bf16.msra.mxu0 %v932
      %952 = vmatpush.bf16.msra.mxu0 %v931
      %953 = vmatpush.bf16.msra.mxu0 %v930
      %954 = vmatmul.bf16.gmra.mxu0 %v846
      %v955 = vpop.f32.mrf.mxu0
      %v956 = vadd.f32 %v896, %v955
      %v957 = vpop.f32.mrf.mxu0
      %v958 = vadd.f32 %v896, %v957
      %959 = vmatmul.bf16.gmra.mxu0 %v847
      %v960 = vpop.f32.mrf.mxu0
      %v961 = vadd.f32 %v896, %v960
      %v962 = vpop.f32.mrf.mxu0
      %v963 = vadd.f32 %v896, %v962
      %964 = vmatmul.bf16.gmra.mxu0 %v848
      %v965 = vpop.f32.mrf.mxu0
      %v966 = vadd.f32 %v896, %v965
      %v967 = vpop.f32.mrf.mxu0
      %v968 = vadd.f32 %v896, %v967
      %969 = vmatmul.bf16.gmra.mxu0 %v849
      %v970 = vpop.f32.mrf.mxu0
      %v971 = vadd.f32 %v896, %v970
      %v972 = vpop.f32.mrf.mxu0
      %v973 = vadd.f32 %v896, %v972
      %974 = vmatmul.bf16.gmra.mxu0 %v850
      %v975 = vpop.f32.mrf.mxu0
      %v976 = vadd.f32 %v896, %v975
      %v977 = vpop.f32.mrf.mxu0
      %v978 = vadd.f32 %v896, %v977
      %979 = vmatmul.bf16.gmra.mxu0 %v851
      %v980 = vpop.f32.mrf.mxu0
      %v981 = vadd.f32 %v896, %v980
      %v982 = vpop.f32.mrf.mxu0
      %v983 = vadd.f32 %v896, %v982
      %984 = vmatmul.bf16.gmra.mxu0 %v852
      %v985 = vpop.f32.mrf.mxu0
      %v986 = vadd.f32 %v896, %v985
      %v987 = vpop.f32.mrf.mxu0
      %v988 = vadd.f32 %v896, %v987
      %989 = vmatmul.bf16.gmra.mxu0 %v853
      %v990 = vpop.f32.mrf.mxu0
      %v991 = vadd.f32 %v896, %v990
      %v992 = vpop.f32.mrf.mxu0
      %v993 = vadd.f32 %v896, %v992
      %994 = vmatmul.bf16.gmra.mxu0 %v854
      %v995 = vpop.f32.mrf.mxu0
      %v996 = vadd.f32 %v896, %v995
      %v997 = vpop.f32.mrf.mxu0
      %v998 = vadd.f32 %v896, %v997
      %999 = vmatmul.bf16.gmra.mxu0 %v855
      %v1000 = vpop.f32.mrf.mxu0
      %v1001 = vadd.f32 %v896, %v1000
      %v1002 = vpop.f32.mrf.mxu0
      %v1003 = vadd.f32 %v896, %v1002
      %1004 = vmatmul.bf16.gmra.mxu0 %v856
      %v1005 = vpop.f32.mrf.mxu0
      %v1006 = vadd.f32 %v896, %v1005
      %v1007 = vpop.f32.mrf.mxu0
      %v1008 = vadd.f32 %v896, %v1007
      %1009 = vmatmul.bf16.gmra.mxu0 %v857
      %v1010 = vpop.f32.mrf.mxu0
      %v1011 = vadd.f32 %v896, %v1010
      %v1012 = vpop.f32.mrf.mxu0
      %v1013 = vadd.f32 %v896, %v1012
      %1014 = vmatmul.bf16.gmra.mxu0 %v858
      %v1015 = vpop.f32.mrf.mxu0
      %v1016 = vadd.f32 %v896, %v1015
      %v1017 = vpop.f32.mrf.mxu0
      %v1018 = vadd.f32 %v896, %v1017
      %1019 = vmatmul.bf16.gmra.mxu0 %v859
      %v1020 = vpop.f32.mrf.mxu0
      %v1021 = vadd.f32 %v896, %v1020
      %v1022 = vpop.f32.mrf.mxu0
      %v1023 = vadd.f32 %v896, %v1022
      %1024 = vmatmul.bf16.gmra.mxu0 %v860
      %v1025 = vpop.f32.mrf.mxu0
      %v1026 = vadd.f32 %v896, %v1025
      %v1027 = vpop.f32.mrf.mxu0
      %v1028 = vadd.f32 %v896, %v1027
      %1029 = vmatmul.bf16.gmra.mxu0 %v861
      %v1030 = vpop.f32.mrf.mxu0
      %v1031 = vadd.f32 %v896, %v1030
      %v1032 = vpop.f32.mrf.mxu0
      %v1033 = vadd.f32 %v896, %v1032
      %1034 = vmatmul.bf16.gmra.mxu0 %v862
      %v1035 = vpop.f32.mrf.mxu0
      %v1036 = vadd.f32 %v896, %v1035
      %v1037 = vpop.f32.mrf.mxu0
      %v1038 = vadd.f32 %v896, %v1037
      %1039 = vmatmul.bf16.gmra.mxu0 %v863
      %v1040 = vpop.f32.mrf.mxu0
      %v1041 = vadd.f32 %v896, %v1040
      %v1042 = vpop.f32.mrf.mxu0
      %v1043 = vadd.f32 %v896, %v1042
      %1044 = vmatmul.bf16.gmra.mxu0 %v864
      %v1045 = vpop.f32.mrf.mxu0
      %v1046 = vadd.f32 %v896, %v1045
      %v1047 = vpop.f32.mrf.mxu0
      %v1048 = vadd.f32 %v896, %v1047
      %1049 = vmatmul.bf16.gmra.mxu0 %v865
      %v1050 = vpop.f32.mrf.mxu0
      %v1051 = vadd.f32 %v896, %v1050
      %v1052 = vpop.f32.mrf.mxu0
      %v1053 = vadd.f32 %v896, %v1052
      %1054 = vmatmul.bf16.gmra.mxu0 %v866
      %v1055 = vpop.f32.mrf.mxu0
      %v1056 = vadd.f32 %v896, %v1055
      %v1057 = vpop.f32.mrf.mxu0
      %v1058 = vadd.f32 %v896, %v1057
      %1059 = vmatmul.bf16.gmra.mxu0 %v867
      %v1060 = vpop.f32.mrf.mxu0
      %v1061 = vadd.f32 %v896, %v1060
      %v1062 = vpop.f32.mrf.mxu0
      %v1063 = vadd.f32 %v896, %v1062
      %1064 = vmatmul.bf16.gmra.mxu0 %v868
      %v1065 = vpop.f32.mrf.mxu0
      %v1066 = vadd.f32 %v896, %v1065
      %v1067 = vpop.f32.mrf.mxu0
      %v1068 = vadd.f32 %v896, %v1067
      %1069 = vmatmul.bf16.gmra.mxu0 %v869
      %v1070 = vpop.f32.mrf.mxu0
      %v1071 = vadd.f32 %v896, %v1070
      %v1072 = vpop.f32.mrf.mxu0
      %v1073 = vadd.f32 %v896, %v1072
      %1074 = vmatmul.bf16.gmra.mxu0 %v870
      %v1075 = vpop.f32.mrf.mxu0
      %v1076 = vadd.f32 %v896, %v1075
      %v1077 = vpop.f32.mrf.mxu0
      %v1078 = vadd.f32 %v896, %v1077
      %1079 = vmatmul.bf16.gmra.mxu0 %v871
      %v1080 = vpop.f32.mrf.mxu0
      %v1081 = vadd.f32 %v896, %v1080
      %v1082 = vpop.f32.mrf.mxu0
      %v1083 = vadd.f32 %v896, %v1082
      %1084 = vmatmul.bf16.gmra.mxu0 %v872
      %v1085 = vpop.f32.mrf.mxu0
      %v1086 = vadd.f32 %v896, %v1085
      %v1087 = vpop.f32.mrf.mxu0
      %v1088 = vadd.f32 %v896, %v1087
      %1089 = vmatmul.bf16.gmra.mxu0 %v873
      %v1090 = vpop.f32.mrf.mxu0
      %v1091 = vadd.f32 %v896, %v1090
      %v1092 = vpop.f32.mrf.mxu0
      %v1093 = vadd.f32 %v896, %v1092
      %1094 = vmatmul.bf16.gmra.mxu0 %v874
      %v1095 = vpop.f32.mrf.mxu0
      %v1096 = vadd.f32 %v896, %v1095
      %v1097 = vpop.f32.mrf.mxu0
      %v1098 = vadd.f32 %v896, %v1097
      %1099 = vmatmul.bf16.gmra.mxu0 %v875
      %v1100 = vpop.f32.mrf.mxu0
      %v1101 = vadd.f32 %v896, %v1100
      %v1102 = vpop.f32.mrf.mxu0
      %v1103 = vadd.f32 %v896, %v1102
      %1104 = vmatmul.bf16.gmra.mxu0 %v876
      %v1105 = vpop.f32.mrf.mxu0
      %v1106 = vadd.f32 %v896, %v1105
      %v1107 = vpop.f32.mrf.mxu0
      %v1108 = vadd.f32 %v896, %v1107
      %1109 = vmatmul.bf16.gmra.mxu0 %v877
      %v1110 = vpop.f32.mrf.mxu0
      %v1111 = vadd.f32 %v896, %v1110
      %v1112 = vpop.f32.mrf.mxu0
      %v1113 = vadd.f32 %v896, %v1112
      %1114 = vdwg.mxu0
      %v1115 = vmax.f32 %v956, 0.0
      %v1116 = vmax.f32 %v958, 0.0
      %v1117 = vmax.f32 %v961, 0.0
      %v1118 = vmax.f32 %v963, 0.0
      %v1119 = vmax.f32 %v966, 0.0
      %v1120 = vmax.f32 %v968, 0.0
      %v1121 = vmax.f32 %v971, 0.0
      %v1122 = vmax.f32 %v973, 0.0
      %v1123 = vmax.f32 %v976, 0.0
      %v1124 = vmax.f32 %v978, 0.0
      %v1125 = vmax.f32 %v981, 0.0
      %v1126 = vmax.f32 %v983, 0.0
      %v1127 = vmax.f32 %v986, 0.0
      %v1128 = vmax.f32 %v988, 0.0
      %v1129 = vmax.f32 %v991, 0.0
      %v1130 = vmax.f32 %v993, 0.0
      %v1131 = vmax.f32 %v996, 0.0
      %v1132 = vmax.f32 %v998, 0.0
      %v1133 = vmax.f32 %v1001, 0.0
      %v1134 = vmax.f32 %v1003, 0.0
      %v1135 = vmax.f32 %v1006, 0.0
      %v1136 = vmax.f32 %v1008, 0.0
      %v1137 = vmax.f32 %v1011, 0.0
      %v1138 = vmax.f32 %v1013, 0.0
      %v1139 = vmax.f32 %v1016, 0.0
      %v1140 = vmax.f32 %v1018, 0.0
      %v1141 = vmax.f32 %v1021, 0.0
      %v1142 = vmax.f32 %v1023, 0.0
      %v1143 = vmax.f32 %v1026, 0.0
      %v1144 = vmax.f32 %v1028, 0.0
      %v1145 = vmax.f32 %v1031, 0.0
      %v1146 = vmax.f32 %v1033, 0.0
      %v1147 = vmax.f32 %v1036, 0.0
      %v1148 = vmax.f32 %v1038, 0.0
      %v1149 = vmax.f32 %v1041, 0.0
      %v1150 = vmax.f32 %v1043, 0.0
      %v1151 = vmax.f32 %v1046, 0.0
      %v1152 = vmax.f32 %v1048, 0.0
      %v1153 = vmax.f32 %v1051, 0.0
      %v1154 = vmax.f32 %v1053, 0.0
      %v1155 = vmax.f32 %v1056, 0.0
      %v1156 = vmax.f32 %v1058, 0.0
      %v1157 = vmax.f32 %v1061, 0.0
      %v1158 = vmax.f32 %v1063, 0.0
      %v1159 = vmax.f32 %v1066, 0.0
      %v1160 = vmax.f32 %v1068, 0.0
      %v1161 = vmax.f32 %v1071, 0.0
      %v1162 = vmax.f32 %v1073, 0.0
      %v1163 = vmax.f32 %v1076, 0.0
      %v1164 = vmax.f32 %v1078, 0.0
      %v1165 = vmax.f32 %v1081, 0.0
      %v1166 = vmax.f32 %v1083, 0.0
      %v1167 = vmax.f32 %v1086, 0.0
      %v1168 = vmax.f32 %v1088, 0.0
      %v1169 = vmax.f32 %v1091, 0.0
      %v1170 = vmax.f32 %v1093, 0.0
      %v1171 = vmax.f32 %v1096, 0.0
      %v1172 = vmax.f32 %v1098, 0.0
      %v1173 = vmax.f32 %v1101, 0.0
      %v1174 = vmax.f32 %v1103, 0.0
      %v1175 = vmax.f32 %v1106, 0.0
      %v1176 = vmax.f32 %v1108, 0.0
      %v1177 = vmax.f32 %v1111, 0.0
      %v1178 = vmax.f32 %v1113, 0.0
      %v1179 = vpack.c.bf16 %v1116, %v1115
      %v1180 = vpack.c.bf16 %v1118, %v1117
      %v1181 = vpack.c.bf16 %v1120, %v1119
      %v1182 = vpack.c.bf16 %v1122, %v1121
      %v1183 = vpack.c.bf16 %v1124, %v1123
      %v1184 = vpack.c.bf16 %v1126, %v1125
      %v1185 = vpack.c.bf16 %v1128, %v1127
      %v1186 = vpack.c.bf16 %v1130, %v1129
      %v1187 = vpack.c.bf16 %v1132, %v1131
      %v1188 = vpack.c.bf16 %v1134, %v1133
      %v1189 = vpack.c.bf16 %v1136, %v1135
      %v1190 = vpack.c.bf16 %v1138, %v1137
      %v1191 = vpack.c.bf16 %v1140, %v1139
      %v1192 = vpack.c.bf16 %v1142, %v1141
      %v1193 = vpack.c.bf16 %v1144, %v1143
      %v1194 = vpack.c.bf16 %v1146, %v1145
      %v1195 = vpack.c.bf16 %v1148, %v1147
      %v1196 = vpack.c.bf16 %v1150, %v1149
      %v1197 = vpack.c.bf16 %v1152, %v1151
      %v1198 = vpack.c.bf16 %v1154, %v1153
      %v1199 = vpack.c.bf16 %v1156, %v1155
      %v1200 = vpack.c.bf16 %v1158, %v1157
      %v1201 = vpack.c.bf16 %v1160, %v1159
      %v1202 = vpack.c.bf16 %v1162, %v1161
      %v1203 = vpack.c.bf16 %v1164, %v1163
      %v1204 = vpack.c.bf16 %v1166, %v1165
      %v1205 = vpack.c.bf16 %v1168, %v1167
      %v1206 = vpack.c.bf16 %v1170, %v1169
      %v1207 = vpack.c.bf16 %v1172, %v1171
      %v1208 = vpack.c.bf16 %v1174, %v1173
      %v1209 = vpack.c.bf16 %v1176, %v1175
      %v1210 = vpack.c.bf16 %v1178, %v1177
      %v1211 = vld [vmem:[%s5] sm:$0xf]
      %v1212 = vld [vmem:[%s5 + $0x4] sm:$0xf]
      %v1213 = vld [vmem:[%s5 + $0x8] sm:$0xf]
      %v1214 = vld [vmem:[%s5 + $0xc] sm:$0xf]
      %v1215 = vld [vmem:[%s5 + $0x10] sm:$0xf]
      %v1216 = vld [vmem:[%s5 + $0x14] sm:$0xf]
      %v1217 = vld [vmem:[%s5 + $0x18] sm:$0xf]
      %v1218 = vld [vmem:[%s5 + $0x1c] sm:$0xf]
      %v1219 = vld [vmem:[%s5 + $0x20] sm:$0xf]
      %v1220 = vld [vmem:[%s5 + $0x24] sm:$0xf]
      %v1221 = vld [vmem:[%s5 + $0x28] sm:$0xf]
      %v1222 = vld [vmem:[%s5 + $0x2c] sm:$0xf]
      %v1223 = vld [vmem:[%s5 + $0x30] sm:$0xf]
      %v1224 = vld [vmem:[%s5 + $0x34] sm:$0xf]
      %v1225 = vld [vmem:[%s5 + $0x38] sm:$0xf]
      %v1226 = vld [vmem:[%s5 + $0x3c] sm:$0xf]
      %v1227 = vld [vmem:[%s6] sm:$0x1]
      %v1229 = vperm.slane %v1227, 0
      %v1247 = vunpack.c.l.b16 %v1211
      %v1248 = vunpack.c.l.b16 %v1212
      %v1249 = vunpack.c.l.b16 %v1213
      %v1250 = vunpack.c.l.b16 %v1214
      %v1251 = vunpack.c.l.b16 %v1215
      %v1252 = vunpack.c.l.b16 %v1216
      %v1253 = vunpack.c.l.b16 %v1217
      %v1254 = vunpack.c.l.b16 %v1218
      %v1255 = vunpack.c.l.b16 %v1219
      %v1256 = vunpack.c.l.b16 %v1220
      %v1257 = vunpack.c.l.b16 %v1221
      %v1258 = vunpack.c.l.b16 %v1222
      %v1259 = vunpack.c.l.b16 %v1223
      %v1260 = vunpack.c.l.b16 %v1224
      %v1261 = vunpack.c.l.b16 %v1225
      %v1262 = vunpack.c.l.b16 %v1226
      %v1263 = vpack.c.b16 %v1248, %v1247
      %v1264 = vpack.c.b16 %v1250, %v1249
      %v1265 = vpack.c.b16 %v1252, %v1251
      %v1266 = vpack.c.b16 %v1254, %v1253
      %v1267 = vpack.c.b16 %v1256, %v1255
      %v1268 = vpack.c.b16 %v1258, %v1257
      %v1269 = vpack.c.b16 %v1260, %v1259
      %v1270 = vpack.c.b16 %v1262, %v1261
      %1279 = vmatpush.bf16.msra.mxu0 %v1270
      %1280 = vmatpush.bf16.msra.mxu0 %v1269
      %1281 = vmatpush.bf16.msra.mxu0 %v1268
      %1282 = vmatpush.bf16.msra.mxu0 %v1267
      %1283 = vmatpush.bf16.msra.mxu0 %v1266
      %1284 = vmatpush.bf16.msra.mxu0 %v1265
      %1285 = vmatpush.bf16.msra.mxu0 %v1264
      %1286 = vmatpush.bf16.msra.mxu0 %v1263
      %1287 = vmatmul.bf16.gmra.mxu0 %v1179
      %v1288 = vpop.f32.mrf.mxu0
      %v1289 = vadd.f32 %v1229, %v1288
      %v1290 = vpop.f32.mrf.mxu0
      %v1291 = vadd.f32 %v1229, %v1290
      %1292 = vmatmul.bf16.gmra.mxu0 %v1180
      %v1293 = vpop.f32.mrf.mxu0
      %v1294 = vadd.f32 %v1229, %v1293
      %v1295 = vpop.f32.mrf.mxu0
      %v1296 = vadd.f32 %v1229, %v1295
      %1297 = vmatmul.bf16.gmra.mxu0 %v1181
      %v1298 = vpop.f32.mrf.mxu0
      %v1299 = vadd.f32 %v1229, %v1298
      %v1300 = vpop.f32.mrf.mxu0
      %v1301 = vadd.f32 %v1229, %v1300
      %1302 = vmatmul.bf16.gmra.mxu0 %v1182
      %v1303 = vpop.f32.mrf.mxu0
      %v1304 = vadd.f32 %v1229, %v1303
      %v1305 = vpop.f32.mrf.mxu0
      %v1306 = vadd.f32 %v1229, %v1305
      %1307 = vmatmul.bf16.gmra.mxu0 %v1183
      %v1308 = vpop.f32.mrf.mxu0
      %v1309 = vadd.f32 %v1229, %v1308
      %v1310 = vpop.f32.mrf.mxu0
      %v1311 = vadd.f32 %v1229, %v1310
      %1312 = vmatmul.bf16.gmra.mxu0 %v1184
      %v1313 = vpop.f32.mrf.mxu0
      %v1314 = vadd.f32 %v1229, %v1313
      %v1315 = vpop.f32.mrf.mxu0
      %v1316 = vadd.f32 %v1229, %v1315
      %1317 = vmatmul.bf16.gmra.mxu0 %v1185
      %v1318 = vpop.f32.mrf.mxu0
      %v1319 = vadd.f32 %v1229, %v1318
      %v1320 = vpop.f32.mrf.mxu0
      %v1321 = vadd.f32 %v1229, %v1320
      %1322 = vmatmul.bf16.gmra.mxu0 %v1186
      %v1323 = vpop.f32.mrf.mxu0
      %v1324 = vadd.f32 %v1229, %v1323
      %v1325 = vpop.f32.mrf.mxu0
      %v1326 = vadd.f32 %v1229, %v1325
      %1327 = vmatmul.bf16.gmra.mxu0 %v1187
      %v1328 = vpop.f32.mrf.mxu0
      %v1329 = vadd.f32 %v1229, %v1328
      %v1330 = vpop.f32.mrf.mxu0
      %v1331 = vadd.f32 %v1229, %v1330
      %1332 = vmatmul.bf16.gmra.mxu0 %v1188
      %v1333 = vpop.f32.mrf.mxu0
      %v1334 = vadd.f32 %v1229, %v1333
      %v1335 = vpop.f32.mrf.mxu0
      %v1336 = vadd.f32 %v1229, %v1335
      %1337 = vmatmul.bf16.gmra.mxu0 %v1189
      %v1338 = vpop.f32.mrf.mxu0
      %v1339 = vadd.f32 %v1229, %v1338
      %v1340 = vpop.f32.mrf.mxu0
      %v1341 = vadd.f32 %v1229, %v1340
      %1342 = vmatmul.bf16.gmra.mxu0 %v1190
      %v1343 = vpop.f32.mrf.mxu0
      %v1344 = vadd.f32 %v1229, %v1343
      %v1345 = vpop.f32.mrf.mxu0
      %v1346 = vadd.f32 %v1229, %v1345
      %1347 = vmatmul.bf16.gmra.mxu0 %v1191
      %v1348 = vpop.f32.mrf.mxu0
      %v1349 = vadd.f32 %v1229, %v1348
      %v1350 = vpop.f32.mrf.mxu0
      %v1351 = vadd.f32 %v1229, %v1350
      %1352 = vmatmul.bf16.gmra.mxu0 %v1192
      %v1353 = vpop.f32.mrf.mxu0
      %v1354 = vadd.f32 %v1229, %v1353
      %v1355 = vpop.f32.mrf.mxu0
      %v1356 = vadd.f32 %v1229, %v1355
      %1357 = vmatmul.bf16.gmra.mxu0 %v1193
      %v1358 = vpop.f32.mrf.mxu0
      %v1359 = vadd.f32 %v1229, %v1358
      %v1360 = vpop.f32.mrf.mxu0
      %v1361 = vadd.f32 %v1229, %v1360
      %1362 = vmatmul.bf16.gmra.mxu0 %v1194
      %v1363 = vpop.f32.mrf.mxu0
      %v1364 = vadd.f32 %v1229, %v1363
      %v1365 = vpop.f32.mrf.mxu0
      %v1366 = vadd.f32 %v1229, %v1365
      %1367 = vmatmul.bf16.gmra.mxu0 %v1195
      %v1368 = vpop.f32.mrf.mxu0
      %v1369 = vadd.f32 %v1229, %v1368
      %v1370 = vpop.f32.mrf.mxu0
      %v1371 = vadd.f32 %v1229, %v1370
      %1372 = vmatmul.bf16.gmra.mxu0 %v1196
      %v1373 = vpop.f32.mrf.mxu0
      %v1374 = vadd.f32 %v1229, %v1373
      %v1375 = vpop.f32.mrf.mxu0
      %v1376 = vadd.f32 %v1229, %v1375
      %1377 = vmatmul.bf16.gmra.mxu0 %v1197
      %v1378 = vpop.f32.mrf.mxu0
      %v1379 = vadd.f32 %v1229, %v1378
      %v1380 = vpop.f32.mrf.mxu0
      %v1381 = vadd.f32 %v1229, %v1380
      %1382 = vmatmul.bf16.gmra.mxu0 %v1198
      %v1383 = vpop.f32.mrf.mxu0
      %v1384 = vadd.f32 %v1229, %v1383
      %v1385 = vpop.f32.mrf.mxu0
      %v1386 = vadd.f32 %v1229, %v1385
      %1387 = vmatmul.bf16.gmra.mxu0 %v1199
      %v1388 = vpop.f32.mrf.mxu0
      %v1389 = vadd.f32 %v1229, %v1388
      %v1390 = vpop.f32.mrf.mxu0
      %v1391 = vadd.f32 %v1229, %v1390
      %1392 = vmatmul.bf16.gmra.mxu0 %v1200
      %v1393 = vpop.f32.mrf.mxu0
      %v1394 = vadd.f32 %v1229, %v1393
      %v1395 = vpop.f32.mrf.mxu0
      %v1396 = vadd.f32 %v1229, %v1395
      %1397 = vmatmul.bf16.gmra.mxu0 %v1201
      %v1398 = vpop.f32.mrf.mxu0
      %v1399 = vadd.f32 %v1229, %v1398
      %v1400 = vpop.f32.mrf.mxu0
      %v1401 = vadd.f32 %v1229, %v1400
      %1402 = vmatmul.bf16.gmra.mxu0 %v1202
      %v1403 = vpop.f32.mrf.mxu0
      %v1404 = vadd.f32 %v1229, %v1403
      %v1405 = vpop.f32.mrf.mxu0
      %v1406 = vadd.f32 %v1229, %v1405
      %1407 = vmatmul.bf16.gmra.mxu0 %v1203
      %v1408 = vpop.f32.mrf.mxu0
      %v1409 = vadd.f32 %v1229, %v1408
      %v1410 = vpop.f32.mrf.mxu0
      %v1411 = vadd.f32 %v1229, %v1410
      %1412 = vmatmul.bf16.gmra.mxu0 %v1204
      %v1413 = vpop.f32.mrf.mxu0
      %v1414 = vadd.f32 %v1229, %v1413
      %v1415 = vpop.f32.mrf.mxu0
      %v1416 = vadd.f32 %v1229, %v1415
      %1417 = vmatmul.bf16.gmra.mxu0 %v1205
      %v1418 = vpop.f32.mrf.mxu0
      %v1419 = vadd.f32 %v1229, %v1418
      %v1420 = vpop.f32.mrf.mxu0
      %v1421 = vadd.f32 %v1229, %v1420
      %1422 = vmatmul.bf16.gmra.mxu0 %v1206
      %v1423 = vpop.f32.mrf.mxu0
      %v1424 = vadd.f32 %v1229, %v1423
      %v1425 = vpop.f32.mrf.mxu0
      %v1426 = vadd.f32 %v1229, %v1425
      %1427 = vmatmul.bf16.gmra.mxu0 %v1207
      %v1428 = vpop.f32.mrf.mxu0
      %v1429 = vadd.f32 %v1229, %v1428
      %v1430 = vpop.f32.mrf.mxu0
      %v1431 = vadd.f32 %v1229, %v1430
      %1432 = vmatmul.bf16.gmra.mxu0 %v1208
      %v1433 = vpop.f32.mrf.mxu0
      %v1434 = vadd.f32 %v1229, %v1433
      %v1435 = vpop.f32.mrf.mxu0
      %v1436 = vadd.f32 %v1229, %v1435
      %1437 = vmatmul.bf16.gmra.mxu0 %v1209
      %v1438 = vpop.f32.mrf.mxu0
      %v1439 = vadd.f32 %v1229, %v1438
      %v1440 = vpop.f32.mrf.mxu0
      %v1441 = vadd.f32 %v1229, %v1440
      %1442 = vmatmul.bf16.gmra.mxu0 %v1210
      %v1443 = vpop.f32.mrf.mxu0
      %v1444 = vadd.f32 %v1229, %v1443
      %v1445 = vpop.f32.mrf.mxu0
      %v1446 = vadd.f32 %v1229, %v1445
      %1447 = vdwg.mxu0
      %1448 = vst.msk [vmem:[%s280] sm:$0xff] %vm512, %v1289
      %1449 = vst.msk [vmem:[%s280 + $0x8] sm:$0xff] %vm512, %v1291
      %1450 = vst.msk [vmem:[%s280 + $0x10] sm:$0xff] %vm512, %v1294
      %1451 = vst.msk [vmem:[%s280 + $0x18] sm:$0xff] %vm512, %v1296
      %1452 = vst.msk [vmem:[%s280 + $0x20] sm:$0xff] %vm512, %v1299
      %1453 = vst.msk [vmem:[%s280 + $0x28] sm:$0xff] %vm512, %v1301
      %1454 = vst.msk [vmem:[%s280 + $0x30] sm:$0xff] %vm512, %v1304
      %1455 = vst.msk [vmem:[%s280 + $0x38] sm:$0xff] %vm512, %v1306
      %1456 = vst.msk [vmem:[%s280 + $0x40] sm:$0xff] %vm512, %v1309
      %1457 = vst.msk [vmem:[%s280 + $0x48] sm:$0xff] %vm512, %v1311
      %1458 = vst.msk [vmem:[%s280 + $0x50] sm:$0xff] %vm512, %v1314
      %1459 = vst.msk [vmem:[%s280 + $0x58] sm:$0xff] %vm512, %v1316
      %1460 = vst.msk [vmem:[%s280 + $0x60] sm:$0xff] %vm512, %v1319
      %1461 = vst.msk [vmem:[%s280 + $0x68] sm:$0xff] %vm512, %v1321
      %1462 = vst.msk [vmem:[%s280 + $0x70] sm:$0xff] %vm512, %v1324
      %1463 = vst.msk [vmem:[%s280 + $0x78] sm:$0xff] %vm512, %v1326
      %1464 = vst.msk [vmem:[%s280 + $0x80] sm:$0xff] %vm512, %v1329
      %1465 = vst.msk [vmem:[%s280 + $0x88] sm:$0xff] %vm512, %v1331
      %1466 = vst.msk [vmem:[%s280 + $0x90] sm:$0xff] %vm512, %v1334
      %1467 = vst.msk [vmem:[%s280 + $0x98] sm:$0xff] %vm512, %v1336
      %1468 = vst.msk [vmem:[%s280 + $0xa0] sm:$0xff] %vm512, %v1339
      %1469 = vst.msk [vmem:[%s280 + $0xa8] sm:$0xff] %vm512, %v1341
      %1470 = vst.msk [vmem:[%s280 + $0xb0] sm:$0xff] %vm512, %v1344
      %1471 = vst.msk [vmem:[%s280 + $0xb8] sm:$0xff] %vm512, %v1346
      %1472 = vst.msk [vmem:[%s280 + $0xc0] sm:$0xff] %vm512, %v1349
      %1473 = vst.msk [vmem:[%s280 + $0xc8] sm:$0xff] %vm512, %v1351
      %1474 = vst.msk [vmem:[%s280 + $0xd0] sm:$0xff] %vm512, %v1354
      %1475 = vst.msk [vmem:[%s280 + $0xd8] sm:$0xff] %vm512, %v1356
      %1476 = vst.msk [vmem:[%s280 + $0xe0] sm:$0xff] %vm512, %v1359
      %1477 = vst.msk [vmem:[%s280 + $0xe8] sm:$0xff] %vm512, %v1361
      %1478 = vst.msk [vmem:[%s280 + $0xf0] sm:$0xff] %vm512, %v1364
      %1479 = vst.msk [vmem:[%s280 + $0xf8] sm:$0xff] %vm512, %v1366
      %1480 = vst.msk [vmem:[%s280 + $0x100] sm:$0xff] %vm512, %v1369
      %1481 = vst.msk [vmem:[%s280 + $0x108] sm:$0xff] %vm512, %v1371
      %1482 = vst.msk [vmem:[%s280 + $0x110] sm:$0xff] %vm512, %v1374
      %1483 = vst.msk [vmem:[%s280 + $0x118] sm:$0xff] %vm512, %v1376
      %1484 = vst.msk [vmem:[%s280 + $0x120] sm:$0xff] %vm512, %v1379
      %1485 = vst.msk [vmem:[%s280 + $0x128] sm:$0xff] %vm512, %v1381
      %1486 = vst.msk [vmem:[%s280 + $0x130] sm:$0xff] %vm512, %v1384
      %1487 = vst.msk [vmem:[%s280 + $0x138] sm:$0xff] %vm512, %v1386
      %1488 = vst.msk [vmem:[%s280 + $0x140] sm:$0xff] %vm512, %v1389
      %1489 = vst.msk [vmem:[%s280 + $0x148] sm:$0xff] %vm512, %v1391
      %1490 = vst.msk [vmem:[%s280 + $0x150] sm:$0xff] %vm512, %v1394
      %1491 = vst.msk [vmem:[%s280 + $0x158] sm:$0xff] %vm512, %v1396
      %1492 = vst.msk [vmem:[%s280 + $0x160] sm:$0xff] %vm512, %v1399
      %1493 = vst.msk [vmem:[%s280 + $0x168] sm:$0xff] %vm512, %v1401
      %1494 = vst.msk [vmem:[%s280 + $0x170] sm:$0xff] %vm512, %v1404
      %1495 = vst.msk [vmem:[%s280 + $0x178] sm:$0xff] %vm512, %v1406
      %1496 = vst.msk [vmem:[%s280 + $0x180] sm:$0xff] %vm512, %v1409
      %1497 = vst.msk [vmem:[%s280 + $0x188] sm:$0xff] %vm512, %v1411
      %1498 = vst.msk [vmem:[%s280 + $0x190] sm:$0xff] %vm512, %v1414
      %1499 = vst.msk [vmem:[%s280 + $0x198] sm:$0xff] %vm512, %v1416
      %1500 = vst.msk [vmem:[%s280 + $0x1a0] sm:$0xff] %vm512, %v1419
      %1501 = vst.msk [vmem:[%s280 + $0x1a8] sm:$0xff] %vm512, %v1421
      %1502 = vst.msk [vmem:[%s280 + $0x1b0] sm:$0xff] %vm512, %v1424
      %1503 = vst.msk [vmem:[%s280 + $0x1b8] sm:$0xff] %vm512, %v1426
      %1504 = vst.msk [vmem:[%s280 + $0x1c0] sm:$0xff] %vm512, %v1429
      %1505 = vst.msk [vmem:[%s280 + $0x1c8] sm:$0xff] %vm512, %v1431
      %1506 = vst.msk [vmem:[%s280 + $0x1d0] sm:$0xff] %vm512, %v1434
      %1507 = vst.msk [vmem:[%s280 + $0x1d8] sm:$0xff] %vm512, %v1436
      %1508 = vst.msk [vmem:[%s280 + $0x1e0] sm:$0xff] %vm512, %v1439
      %1509 = vst.msk [vmem:[%s280 + $0x1e8] sm:$0xff] %vm512, %v1441
      %1510 = vst.msk [vmem:[%s280 + $0x1f0] sm:$0xff] %vm512, %v1444
      %1511 = vst.msk [vmem:[%s280 + $0x1f8] sm:$0xff] %vm512, %v1446
      %s1512 = smul.u32 64, %s18
      %p1513 = scmp.lt.s32.totalorder %s1512, 127
      %s1514 = scalar_select %p1513, %s1512, 127
      %s1515 = smul.addr %s1514, 8
      %s1516 = scalar_lea.vmem %s7, %s1515
      // Predicated region
      $region49: #{tpu_custom_call.1} parent=47 // pred_check
        %p1517 = pneg %p188
      $region50: #{tpu_custom_call.1} parent=47 // pred_check_branch
        %1519 = sbr.rel (%p1517) target = $region52
      $region51: #{tpu_custom_call.1} parent=47 // pred_region
        %s1520 = smul.u32 64, %s18
      $region52: #{tpu_custom_call.1} parent=47 // pred_fallthru
        _
    $region48: #{tpu_custom_call.1} parent=5 // pred_fallthru
      _
    %p1521 = scmp.le.s32.totalorder 2, %s13
    // Predicated region
    $region53: #{tpu_custom_call.1} parent=5 // pred_check
      %p1522 = pneg %p1521
    $region54: #{tpu_custom_call.1} parent=5 // pred_check_branch
      %1524 = sbr.rel (%p1522) target = $region56
    $region55: #{tpu_custom_call.1} parent=5 // pred_region
      %s1525 = ssub.s32 %s13, 2
      // Predicated region
      $region57: #{tpu_custom_call.1} parent=55 // pred_check
        %p1526 = pneg %p194
      $region58: #{tpu_custom_call.1} parent=55 // pred_check_branch
        %1528 = sbr.rel (%p1526) target = $region60
      $region59: #{tpu_custom_call.1} parent=55 // pred_region
        %s1529 = smul.u32 64, %s19
        %p1530 = scmp.lt.s32.totalorder %s1529, 127
        %s1531 = scalar_select %p1530, %s1529, 127
        %s1532 = smul.addr %s1531, 8
        %s1533 = scalar_lea.vmem %s7, %s1532
      $region60: #{tpu_custom_call.1} parent=55 // pred_fallthru
        _
    $region56: #{tpu_custom_call.1} parent=5 // pred_fallthru
      _
  $region6: #{tpu_custom_call.1} parent=0 // loop_footer
    %s17 = sadd.s32 1, %s13
  $region7: #{tpu_custom_call.1} parent=0 // loop_footer_branch
    %12 = sbr.rel target = $region3
  $region8: #{tpu_custom_call.1} parent=0 // loop_exit
    _

</llo_original>
